<compile_context>
chip_gen: v7x
topology: tpu7x:2x2x1
jax: 0.10.0
libtpu: 0.0.40
codegen_flags: <defaults>
</compile_context>

<pallas_src>
import jax
import jax.numpy as jnp
from jax.experimental import pallas as pl
from jax.experimental.pallas import tpu as pltpu


VMEM_LIMIT = 48 * 1024 * 1024


# ----------------------------------------------------------------------------
# pltpu.roll convention probe (sign-robust lane shifts in the tail conv)
# ----------------------------------------------------------------------------

_ROLL_NP_CONVENTION = None


def _roll_matches_numpy():
    """True iff pltpu.roll follows np.roll semantics: out[i] = x[(i - shift) % n]."""
    global _ROLL_NP_CONVENTION
    if _ROLL_NP_CONVENTION is None:
        def k(x_ref, o_ref):
            o_ref[...] = pltpu.roll(x_ref[...], 1, axis=1)
        x = jnp.tile(jnp.arange(128, dtype=jnp.float32)[None, :], (8, 1))
        out = pl.pallas_call(
            k, out_shape=jax.ShapeDtypeStruct((8, 128), jnp.float32))(x)
        _ROLL_NP_CONVENTION = bool(float(out[0, 0]) != 1.0)
    return _ROLL_NP_CONVENTION


# ----------------------------------------------------------------------------
# Pallas kernels
# ----------------------------------------------------------------------------

def _make_mm_kernel(nk):
    """Tiled matmul (bf16 x bf16 -> f32 acc) + bias + per-channel sum / sum^2.
    Output y is stored once, in bf16.  Returns (kernel, needs_acc_scratch)."""
    if nk == 1:
        def kernel(a_ref, b_ref, bias_ref, o_ref, stat_ref):
            y = jnp.dot(a_ref[...], b_ref[...],
                        preferred_element_type=jnp.float32) + bias_ref[...]
            o_ref[...] = y.astype(o_ref.dtype)
            stat_ref[0] = jnp.concatenate(
                [jnp.sum(y, axis=0, keepdims=True),
                 jnp.sum(y * y, axis=0, keepdims=True)], axis=0)
        return kernel, False

    def kernel(a_ref, b_ref, bias_ref, o_ref, stat_ref, acc_ref):
        k = pl.program_id(2)
        d = jnp.dot(a_ref[...], b_ref[...], preferred_element_type=jnp.float32)

        @pl.when(k == 0)
        def _():
            acc_ref[...] = d

        @pl.when(k > 0)
        def _():
            acc_ref[...] += d

        @pl.when(k == nk - 1)
        def _():
            y = acc_ref[...] + bias_ref[...]
            o_ref[...] = y.astype(o_ref.dtype)
            stat_ref[0] = jnp.concatenate(
                [jnp.sum(y, axis=0, keepdims=True),
                 jnp.sum(y * y, axis=0, keepdims=True)], axis=0)
    return kernel, True


def _bn_act_kernel(y_ref, p_ref, o_ref):
    """z = (y - mean) * scale + beta ; out = z if z >= 0 else alpha * z.
    p_ref rows: [mean, scale, beta, alpha] packed as one (4, C) stream."""
    y = y_ref[...]
    z = (y - p_ref[0:1, :]) * p_ref[1:2, :] + p_ref[2:3, :]
    o_ref[...] = jnp.where(z >= 0, z, p_ref[3:4, :] * z).astype(o_ref.dtype)


# ----------------------------------------------------------------------------
# Tiling helpers
# ----------------------------------------------------------------------------

def _pick_tile(dim, cands):
    for c in cands:
        if c <= dim and dim % c == 0:
            return c
    return dim


def _matmul_tiles(M, K, N):
    tm = _pick_tile(M, (2048, 1024, 512, 256, 128, 64, 32, 16, 8))
    if M // tm < 2 and tm >= 256:
        tm //= 2                       # >=2 M tiles -> both v7x TCs get work
    tn = _pick_tile(N, (512, 256, 128))
    # largest K tile keeping the bf16 weight tile <= ~6 MiB
    k_cands = tuple(c for c in (6144, 4608, 3072, 2304, 2048, 1536, 1152,
                                1024, 768, 512, 384, 256, 128)
                    if c * tn * 2 <= (6 << 20))
    tk = _pick_tile(K, k_cands)
    return tm, tk, tn


# ----------------------------------------------------------------------------
# Pallas wrappers
# ----------------------------------------------------------------------------

def matmul_bias_stats(a, b, bias, tiles=None):
    """a: (M, K) bf16, b: (K, N) bf16, bias: (1, N) f32.
    Returns y (M, N) bf16 and per-channel [sum, sum_sq] stats (2, N) f32."""
    M, K = a.shape
    K2, N = b.shape
    assert K == K2
    tm, tk, tn = tiles if tiles is not None else _matmul_tiles(M, K, N)
    assert M % tm == 0 and K % tk == 0 and N % tn == 0
    ni, nj, nk = M // tm, N // tn, K // tk

    kernel, needs_acc = _make_mm_kernel(nk)
    scratch = [pltpu.VMEM((tm, tn), jnp.float32)] if needs_acc else []

    y, stats = pl.pallas_call(
        kernel,
        out_shape=(jax.ShapeDtypeStruct((M, N), jnp.bfloat16),
                   jax.ShapeDtypeStruct((ni, 2, N), jnp.float32)),
        grid_spec=pltpu.PrefetchScalarGridSpec(
            num_scalar_prefetch=0,
            grid=(ni, nj, nk),
            in_specs=[
                pl.BlockSpec((tm, tk), lambda i, j, k: (i, k)),
                pl.BlockSpec((tk, tn), lambda i, j, k: (k, j)),
                pl.BlockSpec((1, tn), lambda i, j, k: (0, j)),
            ],
            out_specs=[
                pl.BlockSpec((tm, tn), lambda i, j, k: (i, j)),
                pl.BlockSpec((1, 2, tn), lambda i, j, k: (i, 0, j)),
            ],
            scratch_shapes=scratch,
        ),
        compiler_params=pltpu.CompilerParams(
            dimension_semantics=("parallel", "parallel", "arbitrary"),
            vmem_limit_bytes=VMEM_LIMIT),
    )(a, b, bias)
    return y, jnp.sum(stats, axis=0)


def bn_act(y, mean, scale, beta, alpha, out_dtype=jnp.bfloat16):
    """Fused BatchNorm-normalize + (P)ReLU; alpha = 0 -> ReLU.  y may be bf16."""
    M, C = y.shape
    tm = _pick_tile(M, (4096, 2048, 1024, 512, 256, 128, 64, 32, 16, 8))
    tc = _pick_tile(C, (512, 256, 128))
    params = jnp.stack([mean, scale, beta, alpha], axis=0).astype(jnp.float32)
    return pl.pallas_call(
        _bn_act_kernel,
        out_shape=jax.ShapeDtypeStruct((M, C), out_dtype),
        grid_spec=pltpu.PrefetchScalarGridSpec(
            num_scalar_prefetch=0,
            grid=(M // tm, C // tc),
            in_specs=[pl.BlockSpec((tm, tc), lambda i, j: (i, j)),
                      pl.BlockSpec((4, tc), lambda i, j: (0, j))],
            out_specs=pl.BlockSpec((tm, tc), lambda i, j: (i, j)),
        ),
        compiler_params=pltpu.CompilerParams(
            dimension_semantics=("parallel", "parallel"),
            vmem_limit_bytes=VMEM_LIMIT),
    )(y, params)


def tail_conv(x_nhwc, w_pack, bias_row):
    """Conv2d(64, 3, 9, 1, 4) with bias, height taps lane-packed.

    x_nhwc:  (B, H, W, 64) bf16
    w_pack:  (9*64, 128) bf16; column 3*kh + co = tap kh / output channel co,
             columns 27..127 are zero.
    bias_row:(1, 128) f32, lanes 0..2 = bias.
    Returns NCHW f32 (B, 3, H, W)."""
    B, H, W, Cin = x_nhwc.shape
    ks = 9
    pad = (ks - 1) // 2
    Kdim = ks * Cin
    Cout = w_pack.shape[1]

    # width-only im2col (bf16): fold the 9 horizontal taps into K
    xw = jnp.pad(x_nhwc, ((0, 0), (0, 0), (pad, pad), (0, 0)))
    xw = jnp.concatenate([xw[:, :, kw:kw + W, :] for kw in range(ks)], axis=-1)
    xw = jnp.pad(xw, ((0, 0), (pad, pad), (0, 0), (0, 0)))      # (B, H+8, W, K)
    a = xw.reshape(B, (H + ks - 1) * W, Kdim)

    halo = (ks - 1) * W                  # extra P rows needed past the tile
    tm = 4 * halo                        # 32 image rows per tile
    if (H * W) % tm != 0:
        tm = halo
    assert (H * W) % tm == 0 and tm % halo == 0
    r = tm // halo
    ni = (H * W) // tm
    assert (ni * r + 1) * halo == (H + ks - 1) * W   # last halo block in bounds

    np_roll = _roll_matches_numpy()
    shifts = [((Cout - 3 * kh) % Cout) if np_roll else (3 * kh)
              for kh in range(ks)]

    def kernel(a_lo_ref, a_hi_ref, w_ref, bias_ref, o_ref):
        # one MXU pass; tap kh lives in lanes 3*kh..3*kh+2 of P
        p_lo = jnp.dot(a_lo_ref[0], w_ref[...],
                       preferred_element_type=jnp.float32)       # (tm, 128)
        p_hi = jnp.dot(a_hi_ref[0], w_ref[...],
                       preferred_element_type=jnp.float32)       # (halo, 128)
        o_ref[0, :, :] = p_lo + bias_ref[...]                    # tap kh = 0
        for kh in range(1, ks):
            off = kh * W
            sh = shifts[kh]                                      # tap kh -> lanes 0..2
            o_ref[0, :tm - off, :] += pltpu.roll(p_lo[off:, :], sh, axis=1)
            o_ref[0, tm - off:, :] += pltpu.roll(p_hi[:off, :], sh, axis=1)

    y = pl.pallas_call(
        kernel,
        out_shape=jax.ShapeDtypeStruct((B, H * W, Cout), jnp.float32),
        grid_spec=pltpu.PrefetchScalarGridSpec(
            num_scalar_prefetch=0,
            grid=(B, ni),
            in_specs=[
                pl.BlockSpec((1, tm, Kdim), lambda b, i: (b, i, 0)),            # tile
                pl.BlockSpec((1, halo, Kdim), lambda b, i: (b, (i + 1) * r, 0)),  # halo
                pl.BlockSpec((Kdim, Cout), lambda b, i: (0, 0)),                # weights
                pl.BlockSpec((1, Cout), lambda b, i: (0, 0)),                   # bias
            ],
            out_specs=pl.BlockSpec((1, tm, Cout), lambda b, i: (b, i, 0)),
        ),
        compiler_params=pltpu.CompilerParams(
            dimension_semantics=("parallel", "parallel"),
            vmem_limit_bytes=VMEM_LIMIT),
    )(a, a, w_pack, bias_row)

    # TODO(synk): emit NCHW directly from the kernel so the final 3-channel
    # slice does not re-read the 128-lane-padded f32 buffer.
    y = y.reshape(B, H, W, Cout)[..., :3]
    return jnp.transpose(y, (0, 3, 1, 2))                        # NCHW


# ----------------------------------------------------------------------------
# Glue (layout / im2col / shuffle) — plain JAX
# ----------------------------------------------------------------------------

def _im2col(x_nhwc, ksize, pad):
    B, H, W, C = x_nhwc.shape
    xp = jnp.pad(x_nhwc, ((0, 0), (pad, pad), (pad, pad), (0, 0)))
    patches = jnp.concatenate(
        [xp[:, kh:kh + H, kw:kw + W, :]
         for kh in range(ksize) for kw in range(ksize)], axis=-1)
    return patches.reshape(B * H * W, ksize * ksize * C)


def pixel_shuffle_nhwc(x, r=2):
    B, H, W, C4 = x.shape
    C = C4 // (r * r)
    x = x.reshape(B, H, W, C, r, r)
    x = jnp.transpose(x, (0, 1, 4, 2, 5, 3))
    return x.reshape(B, H * r, W * r, C)


# ----------------------------------------------------------------------------
# Generator forward
# ----------------------------------------------------------------------------

def _head(x_bc, p):
    """ConvTranspose2d(latent,1024,4,1,0,bias=False) + BN(eps=1e-5) + ReLU."""
    B, L = x_bc.shape
    Cmid, S = 1024, 16
    Mp = 8
    Kp = p["wmat"].shape[0]
    a = jnp.pad(x_bc.astype(jnp.bfloat16), ((0, Mp - B), (0, Kp - L)))
    y, stats = matmul_bias_stats(a, p["wmat"], p["bias0"], tiles=(Mp, Kp, 4096))

    # fused column stats -> per-channel (columns are channel-major x 16 spatial)
    stats = stats.reshape(2, Cmid, S).sum(axis=-1)
    m_real = B * S
    mean = stats[0] / m_real
    var = jnp.maximum(stats[1] / m_real - mean * mean, 0.0)
    scale = p["gamma"] * jax.lax.rsqrt(var + 1e-5)

    y = y[:B].reshape(B, Cmid, 4, 4).transpose(0, 2, 3, 1).reshape(B * S, Cmid)
    y = bn_act(y, mean, scale, p["beta"], jnp.zeros((Cmid,), jnp.float32))
    return y.reshape(B, 4, 4, Cmid)                              # bf16 NHWC


def _upsample(x_nhwc, p):
    """Conv2d(3x3,pad1) + BN(eps=0.8) + PixelShuffle(2) + PReLU (scalar)."""
    B, H, W, _ = x_nhwc.shape
    Cout4 = p["wmat"].shape[1]
    patches = _im2col(x_nhwc, 3, 1)                              # (M, 9*Cin) bf16
    y, stats = matmul_bias_stats(patches, p["wmat"], p["bias"])

    M = B * H * W
    mean = stats[0] / M
    var = jnp.maximum(stats[1] / M - mean * mean, 0.0)           # biased var, clamped
    scale = p["gamma"] * jax.lax.rsqrt(var + 0.8)                # BatchNorm2d(c, 0.8): eps=0.8
    alpha = jnp.broadcast_to(p["prelu"], (Cout4,)).astype(jnp.float32)

    y = bn_act(y, mean, scale, p["beta"], alpha)                 # scalar PReLU commutes w/ shuffle
    y = y.reshape(B, H, W, Cout4)
    return pixel_shuffle_nhwc(y, 2)


def generator_forward(prep, noise, label):
    emb = prep["embed"][label]                                   # embedding lookup
    x = noise * emb                                              # torch.mul(noise, label_embed)
    x = _head(x, prep["head"])                                   # (B, 4, 4, 1024)
    for p in prep["body"]:
        x = _upsample(x, p)                                      # spatial x2 each block
    return tail_conv(x, prep["tail"]["w"], prep["tail"]["b"])    # (B, 3, 128, 128) NCHW


# ----------------------------------------------------------------------------
# Parameters (synthetic init, PyTorch-like shapes) and matmul-ready packing
# ----------------------------------------------------------------------------

def init_params(key, latent_dim, label_dim):
    ks = jax.random.split(key, 20)

    def nrm(k, shape, s=0.05):
        return jax.random.normal(k, shape, jnp.float32) * s

    params = {
        "embed": jax.random.normal(ks[0], (label_dim, latent_dim), jnp.float32),
        "head": dict(
            w=nrm(ks[1], (latent_dim, 1024, 4, 4)),   # ConvTranspose2d (Cin, Cout, kH, kW)
            gamma=jnp.ones((1024,), jnp.float32),
            beta=jnp.zeros((1024,), jnp.float32),
        ),
    }
    body = []
    chans = [(1024, 512), (512, 256), (256, 128), (128, 64), (64, 64)]
    for i, (cin, cout) in enumerate(chans):
        body.append(dict(
            w=nrm(ks[2 + i], (cout * 4, cin, 3, 3)),  # Conv2d (Cout, Cin, kH, kW)
            b=nrm(ks[8 + i], (cout * 4,), 0.01),
            gamma=jnp.ones((cout * 4,), jnp.float32),
            beta=jnp.zeros((cout * 4,), jnp.float32),
            prelu=jnp.float32(0.25),                  # nn.PReLU() default
        ))
    params["body"] = body
    params["tail"] = dict(
        w=nrm(ks[15], (3, 64, 9, 9)),
        b=nrm(ks[16], (3,), 0.01),
    )
    return params


def prepare_params(params):
    """One-time weight repacking to matmul-ready bf16 matrices."""
    prep = {"embed": params["embed"]}

    hw = params["head"]["w"]                                     # (L, 1024, 4, 4)
    L = hw.shape[0]
    Kp = max(128, -(-L // 128) * 128)
    wmat = jnp.pad(hw.reshape(L, 1024 * 16), ((0, Kp - L), (0, 0)))
    prep["head"] = dict(
        wmat=wmat.astype(jnp.bfloat16),
        bias0=jnp.zeros((1, 1024 * 16), jnp.float32),
        gamma=params["head"]["gamma"], beta=params["head"]["beta"])

    body = []
    for p in params["body"]:
        w = p["w"]                                               # (Cout4, Cin, 3, 3)
        Cout4, Cin = w.shape[0], w.shape[1]
        wmat = jnp.transpose(w, (2, 3, 1, 0)).reshape(9 * Cin, Cout4)
        body.append(dict(
            wmat=wmat.astype(jnp.bfloat16),
            bias=p["b"].reshape(1, Cout4).astype(jnp.float32),
            gamma=p["gamma"], beta=p["beta"], prelu=p["prelu"]))
    prep["body"] = body

    # Tail: lane-pack the 9 height taps -> column 3*kh + co of one (576, 128) matrix.
    wt = params["tail"]["w"]                                     # (3, 64, 9, 9) = (co, ci, kh, kw)
    wt = jnp.transpose(wt, (3, 1, 2, 0)).reshape(9 * 64, 9 * 3)  # row = kw*64+ci, col = kh*3+co
    wt = jnp.pad(wt, ((0, 0), (0, 128 - 27))).astype(jnp.bfloat16)
    bt = jnp.pad(params["tail"]["b"], (0, 128 - 3)).reshape(1, 128).astype(jnp.float32)
    prep["tail"] = dict(w=wt, b=bt)
    return prep


if __name__ == "__main__":
    latent_dim, label_dim, batch = 32, 10, 2
    key = jax.random.PRNGKey(0)
    kp, kn, kl = jax.random.split(key, 3)

    params = init_params(kp, latent_dim, label_dim)
    prep = prepare_params(params)
    noise = jax.random.normal(kn, (batch, latent_dim), jnp.float32)
    label = jax.random.randint(kl, (batch,), 0, label_dim)

    _roll_matches_numpy()            # resolve pltpu.roll shift convention once, eagerly

    fwd = jax.jit(generator_forward)
    out = jax.block_until_ready(fwd(prep, noise, label))
    assert out.shape == (batch, 3, 128, 128), out.shape
    assert bool(jnp.all(jnp.isfinite(out)))
    print("KERNEL_OK")
</pallas_src>

<mosaic_0001>
module attributes {stable_mosaic.version = 11 : i64} {
  func.func @k(%arg0: memref<8x128xf32, #tpu.memory_space<vmem>>, %arg1: memref<8x128xf32, #tpu.memory_space<vmem>>) attributes {dimension_semantics = [], scalar_prefetch = 0 : i64, scratch_operands = 0 : i64, tpu.core_type = #tpu.core_type<tc>} {
    %c0 = arith.constant 0 : index
    %c0_0 = arith.constant 0 : index
    %0 = vector.load %arg0[%c0, %c0_0] : memref<8x128xf32, #tpu.memory_space<vmem>>, vector<8x128xf32>
    %c1_i32 = arith.constant 1 : i32
    %1 = tpu.dynamic_rotate %0 by %c1_i32 dim 1 : vector<8x128xf32>, i32 -> vector<8x128xf32>
    %c0_1 = arith.constant 0 : index
    %c0_2 = arith.constant 0 : index
    %2 = vector.load %arg1[%c0_1, %c0_2] : memref<8x128xf32, #tpu.memory_space<vmem>>, vector<8x128xf32>
    tpu.vector_store %arg1[%c0_1, %c0_2], %1 {strides = array<i32>} : memref<8x128xf32, #tpu.memory_space<vmem>>, vector<8x128xf32>,
    return
  }
}

</mosaic_0001>

<llo_original>
// kernel: tpu_custom_call.1
$region0: #{tpu_custom_call.1}
  #allocation0 [shape = 'u32[]', space=smem, size = 0x4, offset = 0x4, fixed_abs, tag = 'smem constant byte address 0x4 - core index']
  #allocation1 [shape = 'u32[144,128]{1,0:T(1,128)}', space=vmem, size = 0x12000, scoped, tag = 'internal scratch']
  %s0 = inlined_call_operand.hbm [shape: f32[8,128], index: 0, kind: input, shape index: {}]
  %s1 = inlined_call_operand.hbm [shape: f32[8,128], index: 1, kind: output, shape index: {}]
  %s2 = sld [smem:[#allocation0]]
  $region18: #{tpu_custom_call.1} parent=0
    _
  %s4 = ssub.s32 1, %s2
  %s5 = scalar_select 0, %s4, %s2
  $region1: #{tpu_custom_call.1} parent=0
    #allocation2 [shape = 'u8[4096]{0}', space=vmem, size = 0x1000, scoped, tag = 'input window, operand 0, single buffered']
    #allocation3 [shape = 's32[1]{0}', space=sflag, size = 0x4, scoped, tag = 'scoped memory for tpu_custom_call.1']
    #allocation4 [shape = 's32[1]{0}', space=sflag, size = 0x4, scoped, tag = 'scoped memory for tpu_custom_call.1']
    #allocation5 [shape = 'u8[4096]{0}', space=vmem, size = 0x1000, scoped, tag = 'output window, operand 0, single buffered']
    %6 = vsyncpa [#allocation3], 0
    %7 = vsyncpa [#allocation4], 0
    // Predicated region
    $region2: #{tpu_custom_call.1} parent=1 // pred_check
      _
    $region3: #{tpu_custom_call.1} parent=1 // pred_check_branch
      %9 = sbr.rel (0) target = $region5
    $region4: #{tpu_custom_call.1} parent=1 // pred_region
      %s11 = ssub.s32 128, 128
      %12 = vsyncadd [#allocation3], %s11
      %s14 = sshll.u32 [#allocation2], 4
      %s15 = int_to_ptr.vmem [resolvable:$true] %s14
      %17 = dma.hbm_to_vmem [thread:$0]  %s0, 128, %s15, [#allocation3]
    $region5: #{tpu_custom_call.1} parent=1 // pred_fallthru
      _
    // Predicated region
    $region6: #{tpu_custom_call.1} parent=1 // pred_check
      _
    $region7: #{tpu_custom_call.1} parent=1 // pred_check_branch
      %19 = sbr.rel (0) target = $region9
    $region8: #{tpu_custom_call.1} parent=1 // pred_region
      %20 = dma.done [#allocation3], 128
    $region9: #{tpu_custom_call.1} parent=1 // pred_fallthru
      _
    %v21 = vld [vmem:[#allocation2] sm:$0xff]
    %22 = vrot.lane.b32.xlu0 %v21, 1
    %v23 = vpop.permute.xlu0 %22
    %24 = vst [vmem:[#allocation5] sm:$0xff] %v23
    // Predicated region
    $region10: #{tpu_custom_call.1} parent=1 // pred_check
      _
    $region11: #{tpu_custom_call.1} parent=1 // pred_check_branch
      %26 = sbr.rel (0) target = $region13
    $region12: #{tpu_custom_call.1} parent=1 // pred_region
      %s28 = ssub.s32 128, 128
      %29 = vsyncadd [#allocation4], %s28
      %s31 = sshll.u32 [#allocation5], 4
      %s32 = int_to_ptr.vmem [resolvable:$true] %s31
      %34 = dma.vmem_to_hbm [thread:$0]  %s32, 128, %s1, [#allocation4]
    $region13: #{tpu_custom_call.1} parent=1 // pred_fallthru
      _
    // Predicated region
    $region14: #{tpu_custom_call.1} parent=1 // pred_check
      _
    $region15: #{tpu_custom_call.1} parent=1 // pred_check_branch
      %36 = sbr.rel (0) target = $region17
    $region16: #{tpu_custom_call.1} parent=1 // pred_region
      %37 = dma.done [#allocation4], 128
    $region17: #{tpu_custom_call.1} parent=1 // pred_fallthru
      _
    %38 = vsyncpa [#allocation3], 1
    %39 = vsyncpa [#allocation4], 1

</llo_original>
